<compile_context>
chip_gen: v7x
topology: tpu7x:2x2x1
jax: 0.10.0
libtpu: 0.0.40
codegen_flags: <defaults>
</compile_context>

<pallas_src>
import jax
import jax.numpy as jnp
from jax.experimental import pallas as pl
from jax.experimental.pallas import tpu as pltpu


def _round_up(a, b):
    return -(-a // b) * b


def _cdiv(a, b):
    return -(-a // b)


def _vmem_bytes(tm, K, N, in_item, out_item):
    # Conservative: count every operand as double-buffered.
    return 2 * (tm * K * in_item + tm * N * out_item + K * N * in_item + N * 4)


def _patch_embed_kernel(x_ref, w_ref, b_ref, o_ref):
    # x_ref: (TM, K) bf16   w_ref: (K, N) bf16   b_ref: (1, N) f32
    # o_ref: (TM, N) out dtype.  MXU matmul with f32 accumulation + f32 bias.
    acc = jnp.dot(x_ref[...], w_ref[...], preferred_element_type=jnp.float32)
    o_ref[...] = (acc + b_ref[...]).astype(o_ref.dtype)


def patch_embed(x, weight, bias, patch_size, *,
                compute_dtype=jnp.bfloat16,
                out_dtype=jnp.bfloat16,
                tile_m=1024,
                use_core_parallel=False,
                vmem_budget_bytes=40 * 1024 * 1024):
    """ViT patch embedding. x: (B,C,H,W); weight: (E,C,p,p); bias: (E,).

    Returns (B, n_patches, E) in `out_dtype` (bf16 by default; the embedding
    is effectively bf16-precision regardless because X/W are fed to the MXU
    in bf16 with f32 accumulation).
    """
    B, C, H, W = x.shape
    E = weight.shape[0]
    p = patch_size
    hp, wp = H // p, W // p
    n_patches = hp * wp

    # ---- host glue: patch extraction as ONE XLA convert+transpose fusion ----
    # TODO(synk): for p % 8 == 0 the swizzle could be done in VMEM inside the
    # kernel (x BlockSpec (nb, C, p, W)), saving xp's HBM write+read, but it
    # needs a lane-splitting reshape (W -> (wp, p)) plus a 4-D transpose that
    # Mosaic relayouts poorly, so it stays as a single fused XLA copy.
    xp = x.astype(compute_dtype).reshape(B, C, hp, p, wp, p)
    xp = jnp.transpose(xp, (0, 2, 4, 1, 3, 5)).reshape(B * n_patches, C * p * p)

    w_mat = weight.reshape(E, C * p * p).T.astype(compute_dtype)   # (K, E)
    b_mat = bias.astype(jnp.float32).reshape(1, E)                 # (1, E)

    M, K = xp.shape
    N = E
    in_item = jnp.dtype(compute_dtype).itemsize
    out_item = jnp.dtype(out_dtype).itemsize

    # ---- balanced row tile that fits the VMEM budget ----
    TM = max(8, min(_round_up(tile_m, 8), _round_up(M, 8)))
    grid_m = _cdiv(M, TM)
    TM = _round_up(_cdiv(M, grid_m), 8)          # balance -> no tiny ragged tail
    while _vmem_bytes(TM, K, N, in_item, out_item) > vmem_budget_bytes and TM > 256:
        TM = max(256, _round_up(TM // 2, 8))     # keep MXU fed (v5e note)
    grid_m = _cdiv(M, TM)

    vmem_limit = int(min(
        max(_vmem_bytes(TM, K, N, in_item, out_item) + 8 * 1024 * 1024,
            32 * 1024 * 1024),
        56 * 1024 * 1024))

    if use_core_parallel:
        # v7x: actually shard row tiles across both TensorCores.
        dim_sem = (pltpu.CORE_PARALLEL,)
    else:
        dim_sem = ("parallel",)

    bytes_accessed = (M * K * in_item        # X read
                      + K * N * in_item      # W read (once)
                      + N * 4                # bias read
                      + M * N * out_item)    # out write

    out = pl.pallas_call(
        _patch_embed_kernel,
        out_shape=jax.ShapeDtypeStruct((M, N), out_dtype),
        grid_spec=pltpu.PrefetchScalarGridSpec(
            num_scalar_prefetch=0,
            grid=(grid_m,),
            in_specs=[
                # X row tiles; K == full array dim so no K padding is needed.
                pl.BlockSpec((TM, K), lambda i: (i, 0)),
                # Projection matrix resident in VMEM (constant index_map).
                pl.BlockSpec((K, N), lambda i: (0, 0)),
                # Bias resident in VMEM.
                pl.BlockSpec((1, N), lambda i: (0, 0)),
            ],
            # N == full array dim; for standard ViT widths (768/1024/1280) the
            # lane dim is 128-aligned so stores are unmasked.
            out_specs=pl.BlockSpec((TM, N), lambda i: (i, 0)),
        ),
        compiler_params=pltpu.CompilerParams(
            dimension_semantics=dim_sem,
            vmem_limit_bytes=vmem_limit,
        ),
        cost_estimate=pl.CostEstimate(
            flops=2 * M * N * K,
            transcendentals=0,
            bytes_accessed=bytes_accessed,
        ),
    )(xp, w_mat, b_mat)

    return out.reshape(B, n_patches, E)


def _check_one(key, B, C, img_size, patch_size, embed_dim):
    kx, kw, kb = jax.random.split(key, 3)
    x = jax.random.normal(kx, (B, C, img_size, img_size), dtype=jnp.float32)
    weight = jax.random.normal(
        kw, (embed_dim, C, patch_size, patch_size), dtype=jnp.float32) * 0.02
    bias = jax.random.normal(kb, (embed_dim,), dtype=jnp.float32) * 0.02

    out = patch_embed(x, weight, bias, patch_size)
    out = jax.block_until_ready(out)

    n_patches = (img_size // patch_size) ** 2
    assert out.shape == (B, n_patches, embed_dim), out.shape

    # Reference: XLA conv in f32 (bf16 compute + bf16 out -> looser tolerance).
    ref = jax.lax.conv_general_dilated(
        x, weight,
        window_strides=(patch_size, patch_size),
        padding="VALID",
        dimension_numbers=("NCHW", "OIHW", "NCHW"),
    ) + bias.reshape(1, embed_dim, 1, 1)
    ref = ref.reshape(B, embed_dim, n_patches).transpose(0, 2, 1)
    err = float(jnp.max(jnp.abs(out.astype(jnp.float32) - ref)))
    assert jnp.allclose(out.astype(jnp.float32), ref, atol=2e-2, rtol=2e-2), err


if __name__ == "__main__":
    # Small shapes consistent with the module (Conv2d patch-embed).
    key = jax.random.PRNGKey(0)
    k1, k2 = jax.random.split(key)
    # p % 8 == 0 case (module default int_chans=3), K = 192 (non-128-multiple).
    _check_one(k1, B=2, C=3, img_size=16, patch_size=8, embed_dim=32)
    # small-patch case, K = 64.
    _check_one(k2, B=2, C=4, img_size=16, patch_size=4, embed_dim=32)
    print("KERNEL_OK")
</pallas_src>

<mosaic_0001>
module attributes {stable_mosaic.version = 11 : i64} {
  func.func @_patch_embed_kernel(%arg0: i32, %arg1: memref<8x192xbf16, #tpu.memory_space<vmem>>, %arg2: memref<192x32xbf16, #tpu.memory_space<vmem>>, %arg3: memref<1x32xf32, #tpu.memory_space<vmem>>, %arg4: memref<8x32xbf16, #tpu.memory_space<vmem>>) attributes {dimension_semantics = [#tpu.dimension_semantics<parallel>], iteration_bounds = array<i64: 1>, scalar_prefetch = 0 : i64, scratch_operands = 0 : i64, tpu.core_type = #tpu.core_type<tc>, window_params = [{transform_indices = @transform_0, window_bounds = array<i64: 8, 192>}, {pipeline_mode = #tpu.pipeline_mode<synchronous>, transform_indices = @transform_1, window_bounds = array<i64: 192, 32>}, {pipeline_mode = #tpu.pipeline_mode<synchronous>, transform_indices = @transform_2, window_bounds = array<i64: 1, 32>}, {transform_indices = @transform_3, window_bounds = array<i64: 8, 32>}]} {
    %c0 = arith.constant 0 : index
    %c0_0 = arith.constant 0 : index
    %0 = vector.load %arg1[%c0, %c0_0] : memref<8x192xbf16, #tpu.memory_space<vmem>>, vector<8x192xbf16>
    %c0_1 = arith.constant 0 : index
    %c0_2 = arith.constant 0 : index
    %1 = vector.load %arg2[%c0_1, %c0_2] : memref<192x32xbf16, #tpu.memory_space<vmem>>, vector<192x32xbf16>
    %cst = arith.constant dense<0.000000e+00> : vector<8x32xf32>
    %2 = tpu.matmul %0, %1, %cst {dimension_numbers = #tpu.dot_dimension_numbers<[1], [0], [0], [1], [0, 0, 1, 1], [], []>} : vector<8x192xbf16>, vector<192x32xbf16>, vector<8x32xf32> -> vector<8x32xf32>
    %c0_3 = arith.constant 0 : index
    %c0_4 = arith.constant 0 : index
    %3 = vector.load %arg3[%c0_3, %c0_4] : memref<1x32xf32, #tpu.memory_space<vmem>>, vector<1x32xf32>
    %4 = vector.broadcast %3 : vector<1x32xf32> to vector<8x32xf32>
    %5 = arith.addf %2, %4 : vector<8x32xf32>
    %6 = arith.truncf %5 : vector<8x32xf32> to vector<8x32xbf16>
    %c0_5 = arith.constant 0 : index
    %c0_6 = arith.constant 0 : index
    %7 = vector.load %arg4[%c0_5, %c0_6] : memref<8x32xbf16, #tpu.memory_space<vmem>>, vector<8x32xbf16>
    tpu.vector_store %arg4[%c0_5, %c0_6], %6 {strides = array<i32>} : memref<8x32xbf16, #tpu.memory_space<vmem>>, vector<8x32xbf16>,
    return
  }
  func.func @transform_0(%arg0: i32) -> (i32, i32) {
    %c0_i32 = arith.constant 0 : i32
    %c0_i32_0 = arith.constant 0 : i32
    return %arg0, %c0_i32 : i32, i32
  }
  func.func @transform_1(%arg0: i32) -> (i32, i32) {
    %c0_i32 = arith.constant 0 : i32
    %c0_i32_0 = arith.constant 0 : i32
    %c0_i32_1 = arith.constant 0 : i32
    return %c0_i32, %c0_i32_0 : i32, i32
  }
  func.func @transform_2(%arg0: i32) -> (i32, i32) {
    %c0_i32 = arith.constant 0 : i32
    %c0_i32_0 = arith.constant 0 : i32
    %c0_i32_1 = arith.constant 0 : i32
    return %c0_i32, %c0_i32_0 : i32, i32
  }
  func.func @transform_3(%arg0: i32) -> (i32, i32) {
    %c0_i32 = arith.constant 0 : i32
    %c0_i32_0 = arith.constant 0 : i32
    return %arg0, %c0_i32 : i32, i32
  }
}

</mosaic_0001>

<llo_original>
// kernel: tpu_custom_call.1
$region0: #{tpu_custom_call.1}
  #allocation0 [shape = 'u32[]', space=smem, size = 0x4, offset = 0x4, fixed_abs, tag = 'smem constant byte address 0x4 - core index']
  #allocation1 [shape = 'u32[144,128]{1,0:T(1,128)}', space=vmem, size = 0x12000, scoped, tag = 'internal scratch']
  %s0 = inlined_call_operand.vmem [shape: bf16[8,192], index: 0, kind: input, shape index: {}]
  %s1 = inlined_call_operand.vmem [shape: bf16[192,32], index: 1, kind: input, shape index: {}]
  %s2 = inlined_call_operand.vmem [shape: f32[1,32], index: 2, kind: input, shape index: {}]
  %s3 = inlined_call_operand.hbm [shape: bf16[8,32], index: 3, kind: output, shape index: {}]
  %s4 = sld [smem:[#allocation0]]
  $region22: #{tpu_custom_call.1} parent=0
    _
  %s6 = ssub.s32 1, %s4
  %s7 = scalar_select 0, %s6, %s4
  $region1: #{tpu_custom_call.1} parent=0
    #allocation2 [shape = 'u8[2048]{0}', space=vmem, size = 0x800, scoped, tag = 'output window, operand 0, single buffered']
    #allocation3 [shape = 's32[1]{0}', space=sflag, size = 0x4, scoped, tag = 'scoped memory for tpu_custom_call.1']
    %8 = vsyncpa [#allocation3], 0
    // Predicated region
    $region2: #{tpu_custom_call.1} parent=1 // pred_check
      _
    $region3: #{tpu_custom_call.1} parent=1 // pred_check_branch
      %10 = sbr.rel (0) target = $region5
    $region4: #{tpu_custom_call.1} parent=1 // pred_region
      _
    $region5: #{tpu_custom_call.1} parent=1 // pred_fallthru
      _
    // Predicated region
    $region6: #{tpu_custom_call.1} parent=1 // pred_check
      _
    $region7: #{tpu_custom_call.1} parent=1 // pred_check_branch
      %12 = sbr.rel (0) target = $region9
    $region8: #{tpu_custom_call.1} parent=1 // pred_region
      _
    $region9: #{tpu_custom_call.1} parent=1 // pred_fallthru
      _
    // Predicated region
    $region10: #{tpu_custom_call.1} parent=1 // pred_check
      _
    $region11: #{tpu_custom_call.1} parent=1 // pred_check_branch
      %14 = sbr.rel (0) target = $region13
    $region12: #{tpu_custom_call.1} parent=1 // pred_region
      _
    $region13: #{tpu_custom_call.1} parent=1 // pred_fallthru
      _
    %v16 = vld [vmem:[%s0] sm:$0xff]
    %v17 = vld [vmem:[%s1] sm:$0xf]
    %v18 = vld [vmem:[%s1 + $0x4] sm:$0xf]
    %v19 = vld [vmem:[%s1 + $0x8] sm:$0xf]
    %v20 = vld [vmem:[%s1 + $0xc] sm:$0xf]
    %v21 = vld [vmem:[%s1 + $0x10] sm:$0xf]
    %v22 = vld [vmem:[%s1 + $0x14] sm:$0xf]
    %v23 = vld [vmem:[%s1 + $0x18] sm:$0xf]
    %v24 = vld [vmem:[%s1 + $0x1c] sm:$0xf]
    %v25 = vld [vmem:[%s1 + $0x20] sm:$0xf]
    %v26 = vld [vmem:[%s1 + $0x24] sm:$0xf]
    %v27 = vld [vmem:[%s1 + $0x28] sm:$0xf]
    %v28 = vld [vmem:[%s1 + $0x2c] sm:$0xf]
    %v29 = vld [vmem:[%s1 + $0x30] sm:$0xf]
    %v30 = vld [vmem:[%s1 + $0x34] sm:$0xf]
    %v31 = vld [vmem:[%s1 + $0x38] sm:$0xf]
    %v32 = vld [vmem:[%s1 + $0x3c] sm:$0xf]
    %v33 = vld [vmem:[%s1 + $0x40] sm:$0xf]
    %v34 = vld [vmem:[%s1 + $0x44] sm:$0xf]
    %v35 = vld [vmem:[%s1 + $0x48] sm:$0xf]
    %v36 = vld [vmem:[%s1 + $0x4c] sm:$0xf]
    %v37 = vld [vmem:[%s1 + $0x50] sm:$0xf]
    %v38 = vld [vmem:[%s1 + $0x54] sm:$0xf]
    %v39 = vld [vmem:[%s1 + $0x58] sm:$0xf]
    %v40 = vld [vmem:[%s1 + $0x5c] sm:$0xf]
    %v41 = vld [vmem:[%s2] sm:$0x1]
    %v43 = vlaneseq
    %v44 = vshrl.u32 %v43, 7
    %v45 = vsub.s32 0, %v44
    %v46 = vrot.slane %v41, %v45
    %v49 = vunpack.c.l.b16 %v16
    %v50 = vunpack.c.h.b16 %v16
    %v51 = vpack.c.b16 %v49, %v49
    %v52 = vpack.c.b16 %v50, %v50
    %v78 = vunpack.c.l.b16 %v17
    %v79 = vunpack.c.l.b16 %v18
    %v80 = vunpack.c.l.b16 %v19
    %v81 = vunpack.c.l.b16 %v20
    %v82 = vunpack.c.l.b16 %v21
    %v83 = vunpack.c.l.b16 %v22
    %v84 = vunpack.c.l.b16 %v23
    %v85 = vunpack.c.l.b16 %v24
    %v86 = vunpack.c.l.b16 %v25
    %v87 = vunpack.c.l.b16 %v26
    %v88 = vunpack.c.l.b16 %v27
    %v89 = vunpack.c.l.b16 %v28
    %v90 = vunpack.c.l.b16 %v29
    %v91 = vunpack.c.l.b16 %v30
    %v92 = vunpack.c.l.b16 %v31
    %v93 = vunpack.c.l.b16 %v32
    %v94 = vunpack.c.l.b16 %v33
    %v95 = vunpack.c.l.b16 %v34
    %v96 = vunpack.c.l.b16 %v35
    %v97 = vunpack.c.l.b16 %v36
    %v98 = vunpack.c.l.b16 %v37
    %v99 = vunpack.c.l.b16 %v38
    %v100 = vunpack.c.l.b16 %v39
    %v101 = vunpack.c.l.b16 %v40
    %v102 = vpack.c.b16 %v79, %v78
    %v103 = vpack.c.b16 %v81, %v80
    %v104 = vpack.c.b16 %v83, %v82
    %v105 = vpack.c.b16 %v85, %v84
    %v106 = vpack.c.b16 %v87, %v86
    %v107 = vpack.c.b16 %v89, %v88
    %v108 = vpack.c.b16 %v91, %v90
    %v109 = vpack.c.b16 %v93, %v92
    %v110 = vpack.c.b16 %v95, %v94
    %v111 = vpack.c.b16 %v97, %v96
    %v112 = vpack.c.b16 %v99, %v98
    %v113 = vpack.c.b16 %v101, %v100
    %vm126 = vcmask 523264
    %v128 = vsel %vm126, %v52, 0
    %130 = vmatprep.subr.bf16.mxu0 0
    %131 = vmatpush1.bf16.msra.mxu0 %v102
    %132 = vmatprep.subr.bf16.mxu0 0
    %133 = vmatpush1.bf16.msra.mxu0 %v103
    %134 = vmatprep.subr.bf16.mxu0 0
    %135 = vmatpush1.bf16.msra.mxu0 %v104
    %136 = vmatprep.subr.bf16.mxu0 0
    %137 = vmatpush1.bf16.msra.mxu0 %v105
    %138 = vmatprep.subr.bf16.mxu0 0
    %139 = vmatpush1.bf16.msra.mxu0 %v106
    %140 = vmatprep.subr.bf16.mxu0 0
    %141 = vmatpush1.bf16.msra.mxu0 %v107
    %142 = vmatprep.subr.bf16.mxu0 0
    %143 = vmatpush1.bf16.msra.mxu0 %v108
    %144 = vmatprep.subr.bf16.mxu0 0
    %145 = vmatpush1.bf16.msra.mxu0 %v109
    %146 = vmatprep.subr.bf16.mxu0 0
    %147 = vmatpush1.bf16.msra.mxu0 %v110
    %148 = vmatprep.subr.bf16.mxu0 0
    %149 = vmatpush1.bf16.msra.mxu0 %v111
    %150 = vmatprep.subr.bf16.mxu0 0
    %151 = vmatpush1.bf16.msra.mxu0 %v112
    %152 = vmatprep.subr.bf16.mxu0 0
    %153 = vmatpush1.bf16.msra.mxu0 %v113
    %154 = vmatprep.subr.bf16.mxu0 0
    %155 = vmatpush1.bf16.msra.mxu0 0
    %156 = vmatprep.subr.bf16.mxu0 0
    %157 = vmatpush1.bf16.msra.mxu0 0
    %158 = vmatprep.subr.bf16.mxu0 0
    %159 = vmatpush1.bf16.msra.mxu0 0
    %160 = vmatprep.subr.bf16.mxu0 0
    %161 = vmatpush1.bf16.msra.mxu0 0
    %162 = vmatprep.mubr.bf16.mxu0 %v128
    %163 = vmatmul.mubr.bf16.gmra.mrb[0].mxu0 %v51
    %v164 = vpop.f32.mrb[0].mxu0
    %v165 = vadd.f32 %v46, %v164
    %v166 = vpop.f32.mrb[0].mxu0
    %v167 = vpop.f32.mrb[0].mxu0
    %v168 = vpop.f32.mrb[0].mxu0
    %169 = vdwg.mxu0
    %v170 = vpack.c.bf16 %v165, %v165
    %vm171 = vcmask 257024
    %172 = vst.msk [vmem:[#allocation2] sm:$0xf] %vm171, %v170
    // Predicated region
    $region14: #{tpu_custom_call.1} parent=1 // pred_check
      _
    $region15: #{tpu_custom_call.1} parent=1 // pred_check_branch
      %174 = sbr.rel (0) target = $region17
    $region16: #{tpu_custom_call.1} parent=1 // pred_region
      %s176 = ssub.s32 64, 64
      %177 = vsyncadd [#allocation3], %s176
      %s179 = sshll.u32 [#allocation2], 4
      %s180 = int_to_ptr.vmem [resolvable:$true] %s179
      %182 = dma.vmem_to_hbm [thread:$0]  %s180, 64, %s3, [#allocation3]
    $region17: #{tpu_custom_call.1} parent=1 // pred_fallthru
      _
    // Predicated region
    $region18: #{tpu_custom_call.1} parent=1 // pred_check
      _
    $region19: #{tpu_custom_call.1} parent=1 // pred_check_branch
      %184 = sbr.rel (0) target = $region21
    $region20: #{tpu_custom_call.1} parent=1 // pred_region
      %185 = dma.done [#allocation3], 64
    $region21: #{tpu_custom_call.1} parent=1 // pred_fallthru
      _
    %186 = vsyncpa [#allocation3], 1

</llo_original>
